<compile_context>
chip_gen: v5e
topology: v5e:2x2
jax: 0.10.0
libtpu: 0.0.40
codegen_flags: <defaults>
</compile_context>

<pallas_src>
import math

import jax
import jax.numpy as jnp
from jax.experimental import pallas as pl
from jax.experimental.pallas import tpu as pltpu


def _round_up(n, m):
    return ((n + m - 1) // m) * m


# ---------------- Kernel 1: node scores (lane-dense, tiled over N) ----------------
def _score_kernel(x_ref, w_ref, s_ref):
    # x_ref: (C, TILE) channel-major lane-dense tile (VMEM);
    # w_ref: (C,) normalized weight scalars (SMEM);
    # s_ref: (1, TILE) lane-dense score slab (VMEM).
    C = x_ref.shape[0]
    acc = x_ref[0:1, :] * w_ref[0]
    for c in range(1, C):                             # C == 3: unrolled scalar-splat VPU FMAs
        acc = acc + x_ref[c:c + 1, :] * w_ref[c]
    s_ref[...] = jnp.tanh(acc)                        # EUP


def compute_scores(x, weight):
    """score = tanh((x @ w) / ||w||_2), returned as a (N,) float32 vector."""
    N, C = x.shape
    w = weight.reshape(-1).astype(jnp.float32)
    w_hat = w * jax.lax.rsqrt(jnp.sum(w * w))         # normalization hoisted (done once)

    # Big lane-dense tiles: per-step overhead (~0.35 us) amortized over up to 64K lanes;
    # per-block footprint (3*TILE*4 in + TILE*4 out, double-buffered) stays ~2 MiB.
    MAX_LANE_TILE = 65536
    if N <= MAX_LANE_TILE:
        lane_tile = _round_up(max(N, 1), 128)
    else:
        lane_tile = MAX_LANE_TILE
    n_pad = _round_up(N, lane_tile)
    num_tiles = n_pad // lane_tile

    # Transpose + zero-pad fused into one XLA copy pass (no zeros-buffer + scatter-set).
    x_t = jnp.pad(x.astype(jnp.float32).T, ((0, 0), (0, n_pad - N)))

    scores = pl.pallas_call(
        _score_kernel,
        out_shape=jax.ShapeDtypeStruct((1, n_pad), jnp.float32),
        grid=(num_tiles,),
        in_specs=[pl.BlockSpec((C, lane_tile), lambda i: (0, i)),
                  pl.BlockSpec(memory_space=pltpu.MemorySpace.SMEM)],   # weight scalars
        out_specs=pl.BlockSpec((1, lane_tile), lambda i: (0, i)),
        # TODO(synk): on v7x, pltpu.CORE_PARALLEL on this axis would split the tile loop
        # across both TensorCores; kept "parallel" here for portability across gens.
        compiler_params=pltpu.CompilerParams(
            dimension_semantics=("parallel",)),
    )(x_t, w_hat)
    return scores[0, :N]


# ---------------- Kernel 2: gather selected rows + gate by score ----------------
def _gather_gate_kernel(perm_ref, score_ref, x_ref, o_ref):
    # perm_ref: (k_pad,) int32 SMEM; score_ref: (k_pad,) f32 SMEM;
    # x_ref: (n_pad, C) f32 VMEM (fully resident); o_ref: (k_pad, C) f32 VMEM.
    num_batches = o_ref.shape[0] // 8

    def body(b, carry):
        base = pl.multiple_of(b * 8, 8)
        rows = []
        for j in range(8):                            # unrolled: 8 gathers per batch
            idx = perm_ref[base + j]                  # SMEM scalar index (trusted < N)
            rows.append(x_ref[pl.ds(idx, 1), :] * score_ref[base + j])
        # One aligned (8, C) store per 8 rows (vs. 8 masked single-row stores).
        o_ref[pl.ds(base, 8), :] = jnp.concatenate(rows, axis=0)
        return carry

    jax.lax.fori_loop(0, num_batches, body, 0)


def gather_and_gate(x, sel_scores, perm):
    """x_out[i] = x[perm[i]] * sel_scores[i]; single kernel invocation, in-VMEM gather."""
    N, C = x.shape
    k = perm.shape[0]
    n_pad = _round_up(N, 8)
    k_pad = _round_up(k, 8)

    # Row-major f32 residency pads each row to 128 lanes (~512 B/node). For graphs where
    # that would not comfortably fit scoped VMEM on any generation, use XLA's fused
    # gather + scale instead (streams x once from HBM, no residency limit).
    if n_pad > 65536:
        return x.astype(jnp.float32)[perm] * sel_scores.astype(jnp.float32)[:, None]

    x_pad = jnp.pad(x.astype(jnp.float32), ((0, n_pad - N), (0, 0)))
    perm_pad = jnp.pad(perm.astype(jnp.int32), (0, k_pad - k))        # pad -> index 0
    s_pad = jnp.pad(sel_scores.astype(jnp.float32), (0, k_pad - k))   # pad -> 0.0 (zero rows)

    # VMEM budget (rows tile-padded from 3 -> 128 lanes), with headroom.
    x_bytes = n_pad * 128 * 4
    o_bytes = k_pad * 128 * 4
    vmem_limit = int(min(max(2 * (x_bytes + o_bytes) + (2 << 20), 16 << 20), 64 << 20))

    out = pl.pallas_call(
        _gather_gate_kernel,
        out_shape=jax.ShapeDtypeStruct((k_pad, C), jnp.float32),
        in_specs=[pl.BlockSpec(memory_space=pltpu.MemorySpace.SMEM),   # perm
                  pl.BlockSpec(memory_space=pltpu.MemorySpace.SMEM),   # selected scores
                  pl.BlockSpec(memory_space=pltpu.MemorySpace.VMEM)],  # x (resident)
        out_specs=pl.BlockSpec(memory_space=pltpu.MemorySpace.VMEM),
        compiler_params=pltpu.CompilerParams(vmem_limit_bytes=vmem_limit),
    )(perm_pad, s_pad, x_pad)
    return out[:k]


# ---------------- Plain-JAX glue ----------------
def filter_adj(edge_index, perm, num_nodes):
    """Keep edges whose endpoints both survive pooling, remapped to new node ids."""
    k = perm.shape[0]
    mask = jnp.zeros((num_nodes,), jnp.bool_).at[perm].set(True)
    new_id = jnp.full((num_nodes,), -1, jnp.int32).at[perm].set(
        jnp.arange(k, dtype=jnp.int32))
    row, col = edge_index[0], edge_index[1]
    keep = mask[row] & mask[col]
    new_edge_index = jnp.where(keep[None, :],
                               jnp.stack([new_id[row], new_id[col]]),
                               -1)
    # TODO(synk): PyG compacts kept edges to a dynamic-length [2, E'] tensor; dynamic
    # output shapes aren't expressible here, so we return padded edges (-1) + keep mask.
    return new_edge_index, keep


def downsample_block(x, edge_index, weight, ratio=0.5):
    """Forward pass of DownSampleBlock (TopKPooling(3), ratio=0.5, tanh, multiplier=1)."""
    N, _ = x.shape
    score = compute_scores(x, weight)                  # (N,), Pallas kernel 1
    k = int(math.ceil(ratio * N))                      # single graph => batch all zeros
    top_scores, perm = jax.lax.top_k(score, k)         # data-dependent top-k: plain JAX
    perm = perm.astype(jnp.int32)
    x_out = gather_and_gate(x, top_scores, perm)       # (k, C), Pallas kernel 2
    new_edge_index, edge_keep = filter_adj(edge_index, perm, N)
    return x_out, new_edge_index, edge_keep, perm, top_scores


if __name__ == "__main__":
    key = jax.random.PRNGKey(0)
    kx, kw, ke = jax.random.split(key, 3)

    N, C, E = 8, 3, 12                                 # small synthetic graph
    x = jax.random.normal(kx, (N, C), dtype=jnp.float32)
    edge_index = jax.random.randint(ke, (2, E), 0, N, dtype=jnp.int32)

    # TopKPooling weight: shape (1, in_channels), uniform(-1/sqrt(C), 1/sqrt(C))
    bound = 1.0 / math.sqrt(C)
    weight = jax.random.uniform(kw, (1, C), jnp.float32, -bound, bound)

    outs = downsample_block(x, edge_index, weight, ratio=0.5)
    outs = jax.block_until_ready(outs)

    x_pooled, new_edges, edge_keep, perm, kept_scores = outs
    assert x_pooled.shape == (4, C)
    assert new_edges.shape == (2, E)
    assert perm.shape == (4,)

    # Cross-check against a pure-JAX reference of the same math.
    w = weight.reshape(-1)
    ref_score = jnp.tanh(x @ (w / jnp.linalg.norm(w)))
    ref_s, ref_p = jax.lax.top_k(ref_score, 4)
    ref_x = x[ref_p] * ref_s[:, None]
    assert jnp.allclose(x_pooled, ref_x, atol=1e-5), "mismatch vs JAX reference"

    print("KERNEL_OK")
</pallas_src>

<mosaic_0001>
module attributes {stable_mosaic.version = 11 : i64} {
  func.func @_score_kernel(%arg0: i32, %arg1: memref<3x128xf32, #tpu.memory_space<vmem>>, %arg2: memref<3xf32, #tpu.memory_space<smem>>, %arg3: memref<1x128xf32, #tpu.memory_space<vmem>>) attributes {dimension_semantics = [#tpu.dimension_semantics<parallel>], iteration_bounds = array<i64: 1>, scalar_prefetch = 0 : i64, scratch_operands = 0 : i64, tpu.core_type = #tpu.core_type<tc>, window_params = [{transform_indices = @transform_0, window_bounds = array<i64: 3, 128>}, {transform_indices = @transform_1, window_bounds = array<i64: 3>}, {transform_indices = @transform_2, window_bounds = array<i64: 1, 128>}]} {
    %c0 = arith.constant 0 : index
    %c0_0 = arith.constant 0 : index
    %0 = vector.load %arg1[%c0, %c0_0] : memref<3x128xf32, #tpu.memory_space<vmem>>, vector<1x128xf32>
    %c0_1 = arith.constant 0 : index
    %1 = memref.load %arg2[%c0_1] : memref<3xf32, #tpu.memory_space<smem>>
    %2 = vector.broadcast %1 : f32 to vector<1x128xf32>
    %3 = arith.mulf %0, %2 : vector<1x128xf32>
    %c1 = arith.constant 1 : index
    %c0_2 = arith.constant 0 : index
    %4 = vector.load %arg1[%c1, %c0_2] : memref<3x128xf32, #tpu.memory_space<vmem>>, vector<1x128xf32>
    %c1_3 = arith.constant 1 : index
    %5 = memref.load %arg2[%c1_3] : memref<3xf32, #tpu.memory_space<smem>>
    %6 = vector.broadcast %5 : f32 to vector<1x128xf32>
    %7 = arith.mulf %4, %6 : vector<1x128xf32>
    %8 = arith.addf %3, %7 : vector<1x128xf32>
    %c2 = arith.constant 2 : index
    %c0_4 = arith.constant 0 : index
    %9 = vector.load %arg1[%c2, %c0_4] : memref<3x128xf32, #tpu.memory_space<vmem>>, vector<1x128xf32>
    %c2_5 = arith.constant 2 : index
    %10 = memref.load %arg2[%c2_5] : memref<3xf32, #tpu.memory_space<smem>>
    %11 = vector.broadcast %10 : f32 to vector<1x128xf32>
    %12 = arith.mulf %9, %11 : vector<1x128xf32>
    %13 = arith.addf %8, %12 : vector<1x128xf32>
    %14 = math.tanh %13 : vector<1x128xf32>
    %c0_6 = arith.constant 0 : index
    %c0_7 = arith.constant 0 : index
    %15 = vector.load %arg3[%c0_6, %c0_7] : memref<1x128xf32, #tpu.memory_space<vmem>>, vector<1x128xf32>
    tpu.vector_store %arg3[%c0_6, %c0_7], %14 {strides = array<i32>} : memref<1x128xf32, #tpu.memory_space<vmem>>, vector<1x128xf32>,
    return
  }
  func.func @transform_0(%arg0: i32) -> (i32, i32) {
    %c0_i32 = arith.constant 0 : i32
    %c0_i32_0 = arith.constant 0 : i32
    return %c0_i32, %arg0 : i32, i32
  }
  func.func @transform_1(%arg0: i32) -> i32 {
    %c0_i32 = arith.constant 0 : i32
    %c0_i32_0 = arith.constant 0 : i32
    return %c0_i32 : i32
  }
  func.func @transform_2(%arg0: i32) -> (i32, i32) {
    %c0_i32 = arith.constant 0 : i32
    %c0_i32_0 = arith.constant 0 : i32
    return %c0_i32, %arg0 : i32, i32
  }
}

</mosaic_0001>

<llo_original>
// kernel: tpu_custom_call.1
$region0: #{tpu_custom_call.1}
  #allocation0 [shape = 'u32[]', space=smem, size = 0x4, offset = 0x4, fixed_abs, tag = 'smem constant byte address 0x4 - core index']
  #allocation1 [shape = 'u32[72,128]{1,0:T(1,128)}', space=vmem, size = 0x9000, scoped, tag = 'internal scratch']
  %s0 = inlined_call_operand.hbm [shape: f32[3,128], index: 0, kind: input, shape index: {}]
  %s1 = inlined_call_operand.hbm [shape: f32[3], index: 1, kind: input, shape index: {}]
  %s2 = inlined_call_operand.hbm [shape: f32[1,128], index: 2, kind: output, shape index: {}]
  %s3 = sld [smem:[#allocation0]]
  $region26: #{tpu_custom_call.1} parent=0
    _
  %s5 = ssub.s32 1, %s3
  %s6 = scalar_select 0, %s5, %s3
  $region1: #{tpu_custom_call.1} parent=0
    #allocation2 [shape = 'u8[2048]{0}', space=vmem, size = 0x800, scoped, tag = 'input window, operand 0, single buffered']
    #allocation3 [shape = 's32[1]{0}', space=sflag, size = 0x4, scoped, tag = 'scoped memory for tpu_custom_call.1']
    #allocation4 [shape = 's32[1]{0}', space=sflag, size = 0x4, scoped, tag = 'scoped memory for tpu_custom_call.1']
    #allocation5 [shape = 's32[1]{0}', space=sflag, size = 0x4, scoped, tag = 'scoped memory for tpu_custom_call.1']
    #allocation6 [shape = 'u8[512]{0}', space=smem, size = 0x200, scoped, tag = 'input window, operand 1, single buffered']
    #allocation7 [shape = 'u8[512]{0}', space=vmem, size = 0x400, scoped, tag = 'output window, operand 0, single buffered']
    %7 = vsyncpa [#allocation3], 0
    %8 = vsyncpa [#allocation5], 0
    %9 = vsyncpa [#allocation4], 0
    // Predicated region
    $region2: #{tpu_custom_call.1} parent=1 // pred_check
      _
    $region3: #{tpu_custom_call.1} parent=1 // pred_check_branch
      %11 = sbr.rel (0) target = $region5
    $region4: #{tpu_custom_call.1} parent=1 // pred_region
      %13 = vsyncadd [#allocation3], 0
      %s15 = sshll.u32 %s0, 4
      %s16 = int_to_ptr.hbm [resolvable:$true] %s15
      %s17 = sshll.u32 [#allocation2], 4
      %s18 = int_to_ptr.vmem [resolvable:$true] %s17
      %20 = dma.hbm_to_vmem [thread:$0]  %s16, 64, %s18, [#allocation3]
    $region5: #{tpu_custom_call.1} parent=1 // pred_fallthru
      _
    // Predicated region
    $region6: #{tpu_custom_call.1} parent=1 // pred_check
      _
    $region7: #{tpu_custom_call.1} parent=1 // pred_check_branch
      %22 = sbr.rel (0) target = $region9
    $region8: #{tpu_custom_call.1} parent=1 // pred_region
      %24 = vsyncadd [#allocation5], 0
      %s26 = sshll.u32 %s1, 4
      %s27 = int_to_ptr.hbm [resolvable:$true] %s26
      %29 = dma.hbm_to_smem %s27, 16, [#allocation6], [#allocation5]
    $region9: #{tpu_custom_call.1} parent=1 // pred_fallthru
      _
    // Predicated region
    $region10: #{tpu_custom_call.1} parent=1 // pred_check
      _
    $region11: #{tpu_custom_call.1} parent=1 // pred_check_branch
      %31 = sbr.rel (0) target = $region13
    $region12: #{tpu_custom_call.1} parent=1 // pred_region
      %33 = dma.done [#allocation3], 64
    $region13: #{tpu_custom_call.1} parent=1 // pred_fallthru
      _
    // Predicated region
    $region14: #{tpu_custom_call.1} parent=1 // pred_check
      _
    $region15: #{tpu_custom_call.1} parent=1 // pred_check_branch
      %35 = sbr.rel (0) target = $region17
    $region16: #{tpu_custom_call.1} parent=1 // pred_region
      %37 = dma.done [#allocation5], 16
    $region17: #{tpu_custom_call.1} parent=1 // pred_fallthru
      _
    %38 = sfence
    %v39 = vld [vmem:[#allocation2] sm:$0x1]
    %s40 = sld [smem:[#allocation6]]
    %v41 = vstv %s40
    %v42 = vmul.f32 %v39, %v41
    %v43 = vld [vmem:[#allocation2 + $0x1] sm:$0x1]
    %s44 = sld [smem:[#allocation6 + $0x1]]
    %v45 = vstv %s44
    %v46 = vmul.f32 %v43, %v45
    %v47 = vadd.f32 %v42, %v46
    %v48 = vld [vmem:[#allocation2 + $0x2] sm:$0x1]
    %s49 = sld [smem:[#allocation6 + $0x2]]
    %v50 = vstv %s49
    %v51 = vmul.f32 %v48, %v50
    %v52 = vadd.f32 %v47, %v51
    %v53 = vtanh.pop %v52
    %54 = vst [vmem:[#allocation7] sm:$0x1] %v53
    // Predicated region
    $region18: #{tpu_custom_call.1} parent=1 // pred_check
      _
    $region19: #{tpu_custom_call.1} parent=1 // pred_check_branch
      %56 = sbr.rel (0) target = $region21
    $region20: #{tpu_custom_call.1} parent=1 // pred_region
      %58 = vsyncadd [#allocation4], 0
      %s60 = sshll.u32 [#allocation7], 4
      %s61 = int_to_ptr.vmem [resolvable:$true] %s60
      %s62 = sshll.u32 %s2, 4
      %s63 = int_to_ptr.hbm [resolvable:$true] %s62
      %65 = dma.vmem_to_hbm [thread:$0]  %s61, 16, %s63, [#allocation4]
    $region21: #{tpu_custom_call.1} parent=1 // pred_fallthru
      _
    // Predicated region
    $region22: #{tpu_custom_call.1} parent=1 // pred_check
      _
    $region23: #{tpu_custom_call.1} parent=1 // pred_check_branch
      %67 = sbr.rel (0) target = $region25
    $region24: #{tpu_custom_call.1} parent=1 // pred_region
      %69 = dma.done [#allocation4], 16
    $region25: #{tpu_custom_call.1} parent=1 // pred_fallthru
      _
    %70 = vsyncpa [#allocation3], 1
    %71 = vsyncpa [#allocation4], 1
    %72 = vsyncpa [#allocation5], 1

</llo_original>
